<compile_context>
chip_gen: v7x
topology: tpu7x:2x2x1
jax: 0.10.0
libtpu: 0.0.40
codegen_flags: <defaults>
</compile_context>

<pallas_src>
import jax
import jax.numpy as jnp
from jax import lax
from jax.experimental import pallas as pl
from jax.experimental.pallas import tpu as pltpu


def _round_up(n, m):
    return ((n + m - 1) // m) * m


def _mlp_kernel(x_ref, w1_ref, b1_ref, w2_ref, b2_ref, w3_ref, b3_ref, o_ref):
    x = x_ref[...]                                       # (TB, D)

    # h1 = W1 @ x^T -> (16, TB). dot_general contracts the D axes directly so
    # the batch stays on the 128-lane axis for the rest of the kernel.
    # (At HBM-bound operation any transpose cost here is hidden; see review.)
    h1 = lax.dot_general(
        w1_ref[...], x, (((1,), (1,)), ((), ())),
        preferred_element_type=jnp.float32)
    h1 = jnp.maximum(h1 + b1_ref[...], 0.0)              # (16, TB)

    # h2 = W2 @ h1 -> (8, TB)
    h2 = jnp.dot(w2_ref[...], h1, preferred_element_type=jnp.float32)
    h2 = jnp.maximum(h2 + b2_ref[...], 0.0)              # (8, TB)

    # Final (8 -> 1) layer: VPU broadcast-mul + XLU sublane reduce (skip the
    # tiny N=1 MXU matmul).
    logits = jnp.sum(h2 * w3_ref[...], axis=0, keepdims=True) + b3_ref[...]

    o_ref[...] = jax.nn.sigmoid(logits)                  # (1, TB) lane-dense store


def _choose_batch_tile(B, D, itemsize):
    """Byte-based batch tile.

    The x block is sized to ~4 MiB in VMEM (double-buffered -> 8 MiB),
    accounting for lane padding (a (tb, D) block with D < 128 occupies
    tb * 128 * itemsize bytes).  The tile is then capped so the batch splits
    into at least two grid steps when possible (v7x megacore).
    """
    lane_d = _round_up(D, 128)                           # VMEM lane padding
    bytes_per_row = lane_d * itemsize
    x_block_budget = 4 << 20                             # per buffer
    tb = max(128, (x_block_budget // bytes_per_row) // 128 * 128)
    tb = min(tb, _round_up(B, 128))
    if B > 128:                                          # >=2 steps for 2 TCs
        tb = min(tb, _round_up(pl.cdiv(B, 2), 128))
    if tb >= B:                                          # single full-extent block
        return B
    return tb


def my_model_forward(x, params):
    """x: [B, D] float32 -> [B] float32 (matches PyTorch My_Model.forward)."""
    w1, b1, w2, b2, w3, b3 = params
    B, D = x.shape

    tb = _choose_batch_tile(B, D, x.dtype.itemsize)
    grid = (pl.cdiv(B, tb),)                             # ragged last block is masked

    const = lambda a: pl.BlockSpec(a.shape, lambda i: (0,) * a.ndim)

    cost = pl.CostEstimate(
        flops=2 * B * (16 * D + 16 * 8 + 8),
        transcendentals=B,                               # one exp per sigmoid
        bytes_accessed=int(x.size) * x.dtype.itemsize + B * 4
        + sum(int(p.size) * 4 for p in params),
    )

    out = pl.pallas_call(
        _mlp_kernel,
        out_shape=jax.ShapeDtypeStruct((1, B), jnp.float32),
        grid=grid,
        in_specs=[
            pl.BlockSpec((tb, D), lambda i: (i, 0)),     # x: streamed per tile
            const(w1), const(b1), const(w2), const(b2), const(w3), const(b3),
        ],
        out_specs=pl.BlockSpec((1, tb), lambda i: (0, i)),
        compiler_params=pltpu.CompilerParams(
            dimension_semantics=("parallel",),           # v7x: shard over 2 TCs
            vmem_limit_bytes=48 << 20,                   # > v5e 16MiB default, < v7x 64MiB
        ),
        cost_estimate=cost,
    )(x, w1, b1, w2, b2, w3, b3)

    return out[0]                                        # squeeze(1)


def init_params(input_dim, key):
    """Deterministic init mimicking nn.Linear default (uniform +/- 1/sqrt(fan_in)).

    Weights in PyTorch layout [out, in]; biases as [out, 1] columns.
    """
    keys = jax.random.split(key, 6)

    def linear(kw, kb, fan_in, fan_out):
        bound = 1.0 / jnp.sqrt(jnp.float32(fan_in))
        w = jax.random.uniform(kw, (fan_out, fan_in), jnp.float32, -bound, bound)
        b = jax.random.uniform(kb, (fan_out, 1), jnp.float32, -bound, bound)
        return w, b

    w1, b1 = linear(keys[0], keys[1], input_dim, 16)
    w2, b2 = linear(keys[2], keys[3], 16, 8)
    w3, b3 = linear(keys[4], keys[5], 8, 1)
    # Store w3 as an (8, 1) column so the kernel can broadcast-multiply it
    # against the (8, TB) hidden activations.
    return (w1, b1, w2, b2, w3.T, b3)


if __name__ == "__main__":
    key = jax.random.PRNGKey(0)
    k_x, k_p, k_x2 = jax.random.split(key, 3)

    input_dim = 32
    params = init_params(input_dim, k_p)
    w1, b1, w2, b2, w3c, b3 = params

    def reference(x):
        h1 = jnp.maximum(x @ w1.T + b1[:, 0], 0.0)
        h2 = jnp.maximum(h1 @ w2.T + b2[:, 0], 0.0)
        return jax.nn.sigmoid(h2 @ w3c[:, 0] + b3[0, 0])

    # Small single-tile case (grid = 1, full-extent block, no masking).
    x_small = jax.random.normal(k_x, (8, input_dim), jnp.float32)
    y_small = jax.block_until_ready(my_model_forward(x_small, params))
    assert y_small.shape == (8,)
    assert jnp.allclose(y_small, reference(x_small), atol=1e-5, rtol=1e-5)

    # Multi-tile case with a ragged last block (B=300, tb=256 -> grid=2),
    # exercising the no-pad masked-writeback path and the 2-step parallel axis.
    x_big = jax.random.normal(k_x2, (300, input_dim), jnp.float32)
    y_big = jax.block_until_ready(my_model_forward(x_big, params))
    assert y_big.shape == (300,)
    assert jnp.allclose(y_big, reference(x_big), atol=1e-5, rtol=1e-5)

    print("KERNEL_OK")
</pallas_src>

<mosaic_0001>
module attributes {stable_mosaic.version = 11 : i64} {
  func.func @_mlp_kernel(%arg0: i32, %arg1: memref<8x32xf32, #tpu.memory_space<vmem>>, %arg2: memref<16x32xf32, #tpu.memory_space<vmem>>, %arg3: memref<16x1xf32, #tpu.memory_space<vmem>>, %arg4: memref<8x16xf32, #tpu.memory_space<vmem>>, %arg5: memref<8x1xf32, #tpu.memory_space<vmem>>, %arg6: memref<8x1xf32, #tpu.memory_space<vmem>>, %arg7: memref<1x1xf32, #tpu.memory_space<vmem>>, %arg8: memref<1x8xf32, #tpu.memory_space<vmem>>) attributes {dimension_semantics = [#tpu.dimension_semantics<parallel>], iteration_bounds = array<i64: 1>, scalar_prefetch = 0 : i64, scratch_operands = 0 : i64, tpu.core_type = #tpu.core_type<tc>, window_params = [{transform_indices = @transform_0, window_bounds = array<i64: 8, 32>}, {pipeline_mode = #tpu.pipeline_mode<synchronous>, transform_indices = @transform_1, window_bounds = array<i64: 16, 32>}, {pipeline_mode = #tpu.pipeline_mode<synchronous>, transform_indices = @transform_2, window_bounds = array<i64: 16, 1>}, {pipeline_mode = #tpu.pipeline_mode<synchronous>, transform_indices = @transform_3, window_bounds = array<i64: 8, 16>}, {pipeline_mode = #tpu.pipeline_mode<synchronous>, transform_indices = @transform_4, window_bounds = array<i64: 8, 1>}, {pipeline_mode = #tpu.pipeline_mode<synchronous>, transform_indices = @transform_5, window_bounds = array<i64: 8, 1>}, {pipeline_mode = #tpu.pipeline_mode<synchronous>, transform_indices = @transform_6, window_bounds = array<i64: 1, 1>}, {transform_indices = @transform_7, window_bounds = array<i64: 1, 8>}]} {
    %c0 = arith.constant 0 : index
    %c0_0 = arith.constant 0 : index
    %0 = vector.load %arg1[%c0, %c0_0] : memref<8x32xf32, #tpu.memory_space<vmem>>, vector<8x32xf32>
    %c0_1 = arith.constant 0 : index
    %c0_2 = arith.constant 0 : index
    %1 = vector.load %arg2[%c0_1, %c0_2] : memref<16x32xf32, #tpu.memory_space<vmem>>, vector<16x32xf32>
    %cst = arith.constant dense<0.000000e+00> : vector<16x8xf32>
    %2 = tpu.matmul %1, %0, %cst {dimension_numbers = #tpu.dot_dimension_numbers<[1], [1], [0], [0], [0, 0, 1, 0], [], []>} : vector<16x32xf32>, vector<8x32xf32>, vector<16x8xf32> -> vector<16x8xf32>
    %c0_3 = arith.constant 0 : index
    %c0_4 = arith.constant 0 : index
    %3 = vector.load %arg3[%c0_3, %c0_4] : memref<16x1xf32, #tpu.memory_space<vmem>>, vector<16x1xf32>
    %4 = vector.broadcast %3 : vector<16x1xf32> to vector<16x8xf32>
    %5 = arith.addf %2, %4 : vector<16x8xf32>
    %cst_5 = arith.constant 0.000000e+00 : f32
    %6 = vector.broadcast %cst_5 : f32 to vector<16x8xf32>
    %7 = arith.maximumf %5, %6 : vector<16x8xf32>
    %c0_6 = arith.constant 0 : index
    %c0_7 = arith.constant 0 : index
    %8 = vector.load %arg4[%c0_6, %c0_7] : memref<8x16xf32, #tpu.memory_space<vmem>>, vector<8x16xf32>
    %cst_8 = arith.constant dense<0.000000e+00> : vector<8x8xf32>
    %9 = tpu.matmul %8, %7, %cst_8 {dimension_numbers = #tpu.dot_dimension_numbers<[1], [0], [0], [1], [0, 0, 1, 1], [], []>} : vector<8x16xf32>, vector<16x8xf32>, vector<8x8xf32> -> vector<8x8xf32>
    %c0_9 = arith.constant 0 : index
    %c0_10 = arith.constant 0 : index
    %10 = vector.load %arg5[%c0_9, %c0_10] : memref<8x1xf32, #tpu.memory_space<vmem>>, vector<8x1xf32>
    %11 = vector.broadcast %10 : vector<8x1xf32> to vector<8x8xf32>
    %12 = arith.addf %9, %11 : vector<8x8xf32>
    %cst_11 = arith.constant 0.000000e+00 : f32
    %13 = vector.broadcast %cst_11 : f32 to vector<8x8xf32>
    %14 = arith.maximumf %12, %13 : vector<8x8xf32>
    %c0_12 = arith.constant 0 : index
    %c0_13 = arith.constant 0 : index
    %15 = vector.load %arg6[%c0_12, %c0_13] : memref<8x1xf32, #tpu.memory_space<vmem>>, vector<8x1xf32>
    %16 = vector.broadcast %15 : vector<8x1xf32> to vector<8x8xf32>
    %17 = arith.mulf %14, %16 : vector<8x8xf32>
    %cst_14 = arith.constant dense<0.000000e+00> : vector<8xf32>
    %18 = vector.multi_reduction <add>, %17, %cst_14 [0] : vector<8x8xf32> to vector<8xf32>
    %19 = vector.shape_cast %18 : vector<8xf32> to vector<1x8xf32>
    %c0_15 = arith.constant 0 : index
    %c0_16 = arith.constant 0 : index
    %20 = vector.load %arg7[%c0_15, %c0_16] : memref<1x1xf32, #tpu.memory_space<vmem>>, vector<1x1xf32>
    %21 = vector.broadcast %20 : vector<1x1xf32> to vector<1x8xf32>
    %22 = arith.addf %19, %21 : vector<1x8xf32>
    %23 = arith.negf %22 : vector<1x8xf32>
    %24 = math.exp %23 : vector<1x8xf32>
    %cst_17 = arith.constant 1.000000e+00 : f32
    %25 = vector.broadcast %cst_17 : f32 to vector<1x8xf32>
    %26 = arith.addf %25, %24 : vector<1x8xf32>
    %27 = arith.divf %25, %26 : vector<1x8xf32>
    %c0_18 = arith.constant 0 : index
    %c0_19 = arith.constant 0 : index
    %28 = vector.load %arg8[%c0_18, %c0_19] : memref<1x8xf32, #tpu.memory_space<vmem>>, vector<1x8xf32>
    tpu.vector_store %arg8[%c0_18, %c0_19], %27 {strides = array<i32>} : memref<1x8xf32, #tpu.memory_space<vmem>>, vector<1x8xf32>,
    return
  }
  func.func @transform_0(%arg0: i32) -> (i32, i32) {
    %c0_i32 = arith.constant 0 : i32
    %c0_i32_0 = arith.constant 0 : i32
    return %arg0, %c0_i32 : i32, i32
  }
  func.func @transform_1(%arg0: i32) -> (i32, i32) {
    %c0_i32 = arith.constant 0 : i32
    %c0_i32_0 = arith.constant 0 : i32
    %c0_i32_1 = arith.constant 0 : i32
    return %c0_i32, %c0_i32_0 : i32, i32
  }
  func.func @transform_2(%arg0: i32) -> (i32, i32) {
    %c0_i32 = arith.constant 0 : i32
    %c0_i32_0 = arith.constant 0 : i32
    %c0_i32_1 = arith.constant 0 : i32
    return %c0_i32, %c0_i32_0 : i32, i32
  }
  func.func @transform_3(%arg0: i32) -> (i32, i32) {
    %c0_i32 = arith.constant 0 : i32
    %c0_i32_0 = arith.constant 0 : i32
    %c0_i32_1 = arith.constant 0 : i32
    return %c0_i32, %c0_i32_0 : i32, i32
  }
  func.func @transform_4(%arg0: i32) -> (i32, i32) {
    %c0_i32 = arith.constant 0 : i32
    %c0_i32_0 = arith.constant 0 : i32
    %c0_i32_1 = arith.constant 0 : i32
    return %c0_i32, %c0_i32_0 : i32, i32
  }
  func.func @transform_5(%arg0: i32) -> (i32, i32) {
    %c0_i32 = arith.constant 0 : i32
    %c0_i32_0 = arith.constant 0 : i32
    %c0_i32_1 = arith.constant 0 : i32
    return %c0_i32, %c0_i32_0 : i32, i32
  }
  func.func @transform_6(%arg0: i32) -> (i32, i32) {
    %c0_i32 = arith.constant 0 : i32
    %c0_i32_0 = arith.constant 0 : i32
    %c0_i32_1 = arith.constant 0 : i32
    return %c0_i32, %c0_i32_0 : i32, i32
  }
  func.func @transform_7(%arg0: i32) -> (i32, i32) {
    %c0_i32 = arith.constant 0 : i32
    %c0_i32_0 = arith.constant 0 : i32
    return %c0_i32, %arg0 : i32, i32
  }
}

</mosaic_0001>

<llo_original>
// kernel: tpu_custom_call.1
$region0: #{tpu_custom_call.1}
  #allocation0 [shape = 'u32[]', space=smem, size = 0x4, offset = 0x4, fixed_abs, tag = 'smem constant byte address 0x4 - core index']
  #allocation1 [shape = 'u32[144,128]{1,0:T(1,128)}', space=vmem, size = 0x12000, scoped, tag = 'internal scratch']
  #allocation2 [shape = 'f32[1,1]{1,0:T(1,128)S(1)}', space=vmem, size = 0x200, scoped, tag = 'scoped memory for tpu_custom_call.1']
  %s0 = inlined_call_operand.vmem [shape: f32[8,32], index: 0, kind: input, shape index: {}]
  %s1 = inlined_call_operand.vmem [shape: f32[16,32], index: 1, kind: input, shape index: {}]
  %s2 = inlined_call_operand.vmem [shape: f32[16,1], index: 2, kind: input, shape index: {}]
  %s3 = inlined_call_operand.vmem [shape: f32[8,16], index: 3, kind: input, shape index: {}]
  %s4 = inlined_call_operand.vmem [shape: f32[8,1], index: 4, kind: input, shape index: {}]
  %s5 = inlined_call_operand.vmem [shape: f32[8,1], index: 5, kind: input, shape index: {}]
  %s6 = inlined_call_operand.<no memory space> [shape: f32[1,1], index: 6, kind: input, shape index: {}]
  %s7 = inlined_call_operand.hbm [shape: f32[1,8], index: 7, kind: output, shape index: {}]
  %s8 = sld [smem:[#allocation0]]
  $region38: #{tpu_custom_call.1} parent=0
    _
  %s10 = ssub.s32 1, %s8
  %s11 = scalar_select 0, %s10, %s8
  %v12 = vstv %s6
  %13 = vst [vmem:[#allocation2] sm:$0x1] %v12
  $region1: #{tpu_custom_call.1} parent=0
    #allocation3 [shape = 'u8[512]{0}', space=vmem, size = 0x400, scoped, tag = 'output window, operand 0, single buffered']
    #allocation4 [shape = 's32[1]{0}', space=sflag, size = 0x4, scoped, tag = 'scoped memory for tpu_custom_call.1']
    %14 = vsyncpa [#allocation4], 0
    // Predicated region
    $region2: #{tpu_custom_call.1} parent=1 // pred_check
      _
    $region3: #{tpu_custom_call.1} parent=1 // pred_check_branch
      %16 = sbr.rel (0) target = $region5
    $region4: #{tpu_custom_call.1} parent=1 // pred_region
      _
    $region5: #{tpu_custom_call.1} parent=1 // pred_fallthru
      _
    // Predicated region
    $region6: #{tpu_custom_call.1} parent=1 // pred_check
      _
    $region7: #{tpu_custom_call.1} parent=1 // pred_check_branch
      %18 = sbr.rel (0) target = $region9
    $region8: #{tpu_custom_call.1} parent=1 // pred_region
      _
    $region9: #{tpu_custom_call.1} parent=1 // pred_fallthru
      _
    // Predicated region
    $region10: #{tpu_custom_call.1} parent=1 // pred_check
      _
    $region11: #{tpu_custom_call.1} parent=1 // pred_check_branch
      %20 = sbr.rel (0) target = $region13
    $region12: #{tpu_custom_call.1} parent=1 // pred_region
      _
    $region13: #{tpu_custom_call.1} parent=1 // pred_fallthru
      _
    // Predicated region
    $region14: #{tpu_custom_call.1} parent=1 // pred_check
      _
    $region15: #{tpu_custom_call.1} parent=1 // pred_check_branch
      %22 = sbr.rel (0) target = $region17
    $region16: #{tpu_custom_call.1} parent=1 // pred_region
      _
    $region17: #{tpu_custom_call.1} parent=1 // pred_fallthru
      _
    // Predicated region
    $region18: #{tpu_custom_call.1} parent=1 // pred_check
      _
    $region19: #{tpu_custom_call.1} parent=1 // pred_check_branch
      %24 = sbr.rel (0) target = $region21
    $region20: #{tpu_custom_call.1} parent=1 // pred_region
      _
    $region21: #{tpu_custom_call.1} parent=1 // pred_fallthru
      _
    // Predicated region
    $region22: #{tpu_custom_call.1} parent=1 // pred_check
      _
    $region23: #{tpu_custom_call.1} parent=1 // pred_check_branch
      %26 = sbr.rel (0) target = $region25
    $region24: #{tpu_custom_call.1} parent=1 // pred_region
      _
    $region25: #{tpu_custom_call.1} parent=1 // pred_fallthru
      _
    // Predicated region
    $region26: #{tpu_custom_call.1} parent=1 // pred_check
      _
    $region27: #{tpu_custom_call.1} parent=1 // pred_check_branch
      %28 = sbr.rel (0) target = $region29
    $region28: #{tpu_custom_call.1} parent=1 // pred_region
      _
    $region29: #{tpu_custom_call.1} parent=1 // pred_fallthru
      _
    %v29 = vld [vmem:[%s0] sm:$0xff]
    %v30 = vld [vmem:[%s1] sm:$0xff]
    %v31 = vld [vmem:[%s1 + $0x8] sm:$0xff]
    %v32 = vld [vmem:[%s2] sm:$0xff]
    %v33 = vld [vmem:[%s2 + $0x8] sm:$0xff]
    %35 = vset.pattern.permute.xlu0 0
    %36 = vperm.xlu0 %35, %v32
    %v37 = vpop.permute.xlu0 %36
    %40 = vset.pattern.permute.xlu0 0
    %41 = vperm.xlu0 %40, %v33
    %v42 = vpop.permute.xlu0 %41
    %vm44 = vcmask 261120
    %v46 = vsel %vm44, %v30, 0
    %v49 = vsel %vm44, %v31, 0
    %v52 = vsel %vm44, %v29, 0
    %54 = vmatprep.subr.mxu0 0.0
    %55 = vmatpush1.xpose.msra.mxu0 %v52
    %56 = vmatprep.subr.mxu0 0.0
    %57 = vmatpush1.xpose.msra.mxu0 0.0
    %58 = vmatprep.subr.mxu0 0.0
    %59 = vmatpush1.xpose.msra.mxu0 0.0
    %60 = vmatprep.subr.mxu0 0.0
    %61 = vmatpush1.xpose.msra.mxu0 0.0
    %62 = vmatprep.subr.mxu0 0.0
    %63 = vmatpush1.xpose.msra.mxu0 0.0
    %64 = vmatprep.subr.mxu0 0.0
    %65 = vmatpush1.xpose.msra.mxu0 0.0
    %66 = vmatprep.subr.mxu0 0.0
    %67 = vmatpush1.xpose.msra.mxu0 0.0
    %68 = vmatprep.subr.mxu0 0.0
    %69 = vmatpush1.xpose.msra.mxu0 0.0
    %70 = vmatprep.subr.mxu0 0.0
    %71 = vmatpush1.xpose.msra.mxu0 0.0
    %72 = vmatprep.subr.mxu0 0.0
    %73 = vmatpush1.xpose.msra.mxu0 0.0
    %74 = vmatprep.subr.mxu0 0.0
    %75 = vmatpush1.xpose.msra.mxu0 0.0
    %76 = vmatprep.subr.mxu0 0.0
    %77 = vmatpush1.xpose.msra.mxu0 0.0
    %78 = vmatprep.subr.mxu0 0.0
    %79 = vmatpush1.xpose.msra.mxu0 0.0
    %80 = vmatprep.subr.mxu0 0.0
    %81 = vmatpush1.xpose.msra.mxu0 0.0
    %82 = vmatprep.subr.mxu0 0.0
    %83 = vmatpush1.xpose.msra.mxu0 0.0
    %84 = vmatprep.subr.mxu0 0.0
    %85 = vmatpush1.xpose.msra.mxu0 0.0
    %86 = vmatprep.subr.mxu0 0.0
    %87 = vmatpush1.xpose.msra.mxu0 0.0
    %88 = vmatprep.subr.mxu0 0.0
    %89 = vmatpush1.xpose.msra.mxu0 0.0
    %90 = vmatprep.subr.mxu0 0.0
    %91 = vmatpush1.xpose.msra.mxu0 0.0
    %92 = vmatprep.subr.mxu0 0.0
    %93 = vmatpush1.xpose.msra.mxu0 0.0
    %94 = vmatprep.subr.mxu0 0.0
    %95 = vmatpush1.xpose.msra.mxu0 0.0
    %96 = vmatprep.subr.mxu0 0.0
    %97 = vmatpush1.xpose.msra.mxu0 0.0
    %98 = vmatprep.subr.mxu0 0.0
    %99 = vmatpush1.xpose.msra.mxu0 0.0
    %100 = vmatprep.subr.mxu0 0.0
    %101 = vmatpush1.xpose.msra.mxu0 0.0
    %102 = vmatprep.subr.mxu0 0.0
    %103 = vmatpush1.xpose.msra.mxu0 0.0
    %104 = vmatprep.subr.mxu0 0.0
    %105 = vmatpush1.xpose.msra.mxu0 0.0
    %106 = vmatprep.subr.mxu0 0.0
    %107 = vmatpush1.xpose.msra.mxu0 0.0
    %108 = vmatprep.subr.mxu0 0.0
    %109 = vmatpush1.xpose.msra.mxu0 0.0
    %110 = vmatprep.subr.mxu0 0.0
    %111 = vmatpush1.xpose.msra.mxu0 0.0
    %112 = vmatprep.subr.mxu0 0.0
    %113 = vmatpush1.xpose.msra.mxu0 0.0
    %114 = vmatprep.subr.mxu0 0.0
    %115 = vmatpush1.xpose.msra.mxu0 0.0
    %116 = vmatprep.subr.mxu0 0.0
    %117 = vmatpush1.xpose.msra.mxu0 0.0
    %118 = vmatprep.mubr.f32.mxu0 0.0
    %119 = vmatmul.mubr.f32.gmra.mrb[0].mxu0 %v46
    %v120 = vpop.f32.mrb[0].mxu0
    %v121 = vadd.f32 %v37, %v120
    %v122 = vpop.f32.mrb[0].mxu0
    %123 = vmatprep.mubr.f32.mxu0 0.0
    %124 = vmatmul.mubr.f32.gmra.mrb[0].mxu0 %v49
    %v125 = vpop.f32.mrb[0].mxu0
    %v126 = vadd.f32 %v42, %v125
    %v127 = vpop.f32.mrb[0].mxu0
    %128 = vdwg.mxu0
    %v129 = vmax.f32 %v121, 0.0
    %v130 = vmax.f32 %v126, 0.0
    %v131 = vld [vmem:[%s3] sm:$0xff]
    %v132 = vld [vmem:[%s4] sm:$0xff]
    %134 = vset.pattern.permute.xlu0 0
    %135 = vperm.xlu0 %134, %v132
    %v136 = vpop.permute.xlu0 %135
    %vm138 = vcmask 130048
    %v140 = vsel %vm138, %v131, 0
    %142 = vmatprep.subr.mxu0 0.0
    %143 = vmatpush1.msra.mxu0 %v129
    %144 = vmatprep.subr.mxu0 0.0
    %145 = vmatpush1.msra.mxu0 %v130
    %146 = vmatprep.subr.mxu0 0.0
    %147 = vmatpush1.msra.mxu0 0.0
    %148 = vmatprep.subr.mxu0 0.0
    %149 = vmatpush1.msra.mxu0 0.0
    %150 = vmatprep.subr.mxu0 0.0
    %151 = vmatpush1.msra.mxu0 0.0
    %152 = vmatprep.subr.mxu0 0.0
    %153 = vmatpush1.msra.mxu0 0.0
    %154 = vmatprep.subr.mxu0 0.0
    %155 = vmatpush1.msra.mxu0 0.0
    %156 = vmatprep.subr.mxu0 0.0
    %157 = vmatpush1.msra.mxu0 0.0
    %158 = vmatprep.subr.mxu0 0.0
    %159 = vmatpush1.msra.mxu0 0.0
    %160 = vmatprep.subr.mxu0 0.0
    %161 = vmatpush1.msra.mxu0 0.0
    %162 = vmatprep.subr.mxu0 0.0
    %163 = vmatpush1.msra.mxu0 0.0
    %164 = vmatprep.subr.mxu0 0.0
    %165 = vmatpush1.msra.mxu0 0.0
    %166 = vmatprep.subr.mxu0 0.0
    %167 = vmatpush1.msra.mxu0 0.0
    %168 = vmatprep.subr.mxu0 0.0
    %169 = vmatpush1.msra.mxu0 0.0
    %170 = vmatprep.subr.mxu0 0.0
    %171 = vmatpush1.msra.mxu0 0.0
    %172 = vmatprep.subr.mxu0 0.0
    %173 = vmatpush1.msra.mxu0 0.0
    %174 = vmatprep.subr.mxu0 0.0
    %175 = vmatpush1.msra.mxu0 0.0
    %176 = vmatprep.subr.mxu0 0.0
    %177 = vmatpush1.msra.mxu0 0.0
    %178 = vmatprep.subr.mxu0 0.0
    %179 = vmatpush1.msra.mxu0 0.0
    %180 = vmatprep.subr.mxu0 0.0
    %181 = vmatpush1.msra.mxu0 0.0
    %182 = vmatprep.subr.mxu0 0.0
    %183 = vmatpush1.msra.mxu0 0.0
    %184 = vmatprep.subr.mxu0 0.0
    %185 = vmatpush1.msra.mxu0 0.0
    %186 = vmatprep.subr.mxu0 0.0
    %187 = vmatpush1.msra.mxu0 0.0
    %188 = vmatprep.subr.mxu0 0.0
    %189 = vmatpush1.msra.mxu0 0.0
    %190 = vmatprep.subr.mxu0 0.0
    %191 = vmatpush1.msra.mxu0 0.0
    %192 = vmatprep.subr.mxu0 0.0
    %193 = vmatpush1.msra.mxu0 0.0
    %194 = vmatprep.subr.mxu0 0.0
    %195 = vmatpush1.msra.mxu0 0.0
    %196 = vmatprep.subr.mxu0 0.0
    %197 = vmatpush1.msra.mxu0 0.0
    %198 = vmatprep.subr.mxu0 0.0
    %199 = vmatpush1.msra.mxu0 0.0
    %200 = vmatprep.subr.mxu0 0.0
    %201 = vmatpush1.msra.mxu0 0.0
    %202 = vmatprep.subr.mxu0 0.0
    %203 = vmatpush1.msra.mxu0 0.0
    %204 = vmatprep.subr.mxu0 0.0
    %205 = vmatpush1.msra.mxu0 0.0
    %206 = vmatprep.mubr.f32.mxu0 0.0
    %207 = vmatmul.mubr.f32.gmra.mrb[0].mxu0 %v140
    %v208 = vpop.f32.mrb[0].mxu0
    %v209 = vadd.f32 %v136, %v208
    %v210 = vpop.f32.mrb[0].mxu0
    %211 = vdwg.mxu0
    %v212 = vmax.f32 %v209, 0.0
    %v213 = vld [vmem:[%s5] sm:$0xff]
    %215 = vset.pattern.permute.xlu0 0
    %216 = vperm.xlu0 %215, %v213
    %v217 = vpop.permute.xlu0 %216
    %v219 = vmul.f32 %v212, %v217
    %vm220 = vcmask 64512
    %v221 = vsel %vm220, %v219, 0.0
    %v222 = vrot.slane %v221, 4
    %v223 = vadd.f32 %v221, %v222
    %v224 = vrot.slane %v223, 2
    %v225 = vadd.f32 %v223, %v224
    %v226 = vrot.slane %v225, 1
    %v227 = vadd.f32 %v225, %v226
    %v228 = vld [vmem:[#allocation2] sm:$0x1]
    %230 = vset.pattern.permute.xlu0 0
    %231 = vperm.xlu0 %230, %v228
    %v232 = vpop.permute.xlu0 %231
    %v234 = vlaneseq
    %v235 = vshrl.u32 %v234, 7
    %v236 = vsub.s32 0, %v235
    %v237 = vrot.slane %v232, %v236
    %v238 = vadd.f32 %v227, %v237
    %v239 = vxor.u32 %v238, 2147483648
    %v240 = vmul.f32 %v239, 1.442695
    %v241 = vpow.pop %v240
    %v242 = vadd.f32 %v241, 1.0
    %v243 = vrcp.pop %v242
    %v244 = vmul.f32 1.0, %v243
    %vm245 = vcmask 57344
    %246 = vst.msk [vmem:[#allocation3] sm:$0x1] %vm245, %v244
    // Predicated region
    $region30: #{tpu_custom_call.1} parent=1 // pred_check
      _
    $region31: #{tpu_custom_call.1} parent=1 // pred_check_branch
      %248 = sbr.rel (0) target = $region33
    $region32: #{tpu_custom_call.1} parent=1 // pred_region
      %s250 = ssub.s32 16, 16
      %251 = vsyncadd [#allocation4], %s250
      %s253 = sshll.u32 [#allocation3], 4
      %s254 = int_to_ptr.vmem [resolvable:$true] %s253
      %256 = dma.vmem_to_hbm [thread:$0]  %s254, 16, %s7, [#allocation4]
    $region33: #{tpu_custom_call.1} parent=1 // pred_fallthru
      _
    // Predicated region
    $region34: #{tpu_custom_call.1} parent=1 // pred_check
      _
    $region35: #{tpu_custom_call.1} parent=1 // pred_check_branch
      %258 = sbr.rel (0) target = $region37
    $region36: #{tpu_custom_call.1} parent=1 // pred_region
      %259 = dma.done [#allocation4], 16
    $region37: #{tpu_custom_call.1} parent=1 // pred_fallthru
      _
    %260 = vsyncpa [#allocation4], 1

</llo_original>
